<compile_context>
chip_gen: v7x
topology: tpu7x:2x2x1
jax: 0.10.0
libtpu: 0.0.40
codegen_flags: <defaults>
</compile_context>

<pallas_src>
import functools

import jax
import jax.numpy as jnp
from jax import lax
from jax.experimental import pallas as pl
from jax.experimental.pallas import tpu as pltpu


_SUBLANE = 8
# Conservative per-call VMEM budget for the row-tiled activation streams
# (input + output blocks, double-buffered by the Pallas pipeline).  Keeps the
# kernels inside the default scoped-VMEM limits on every generation
# (16 MiB v5e / 32 MiB v6e / 32-of-64 MiB v7x) without vmem_limit_bytes
# overrides even for dim ~ 4K.
# TODO(synk): for very large dims the weight matrices should also be tiled
# over K/N instead of being held fully resident in VMEM.
_ROW_TILE_VMEM_BUDGET = 4 * 1024 * 1024

_COMPILER_PARAMS = pltpu.CompilerParams(dimension_semantics=("parallel",))


def _choose_row_tile(rows: int, bytes_per_row: int) -> int:
    """Largest row tile that is a multiple of 8 (or covers all rows), fits the
    VMEM budget, and leaves >= 2 grid steps when possible (so the v7x megacore
    can split the grid and the pipeline has some depth)."""
    if rows <= _SUBLANE:
        return rows
    budget_rows = max(_SUBLANE, _ROW_TILE_VMEM_BUDGET // max(1, bytes_per_row))
    at_least_two_steps = max(_SUBLANE, -(-rows // 2))   # cdiv(rows, 2)
    tile = min(rows, budget_rows, at_least_two_steps)
    return max(_SUBLANE, (tile // _SUBLANE) * _SUBLANE)


def _row_blocked_call(kernel, *, rows, row_tile, inputs, out_shapes):
    """pallas_call over a 1-D grid of row tiles.

    `inputs` is a list of (array, row_tiled) pairs.  Row-tiled arrays are
    blocked as (row_tile, *rest) and indexed by the grid step; non-tiled
    arrays (weights) use their full shape with a constant index map, so they
    are DMA'd into VMEM once and stay resident across grid steps.  Ragged
    final blocks are allowed: every kernel is row-local and out-of-bounds
    rows are never written back, so no host-side padding copy is needed.
    """
    grid = (pl.cdiv(rows, row_tile),)

    def in_spec(arr, row_tiled):
        nd = arr.ndim
        if row_tiled:
            block = (row_tile,) + tuple(arr.shape[1:])
            return pl.BlockSpec(block, lambda i, _nd=nd: (i,) + (0,) * (_nd - 1))
        return pl.BlockSpec(tuple(arr.shape), lambda i, _nd=nd: (0,) * _nd)

    in_specs = [in_spec(a, t) for a, t in inputs]
    out_specs = tuple(
        pl.BlockSpec((row_tile,) + tuple(s.shape[1:]),
                     lambda i, _nd=len(s.shape): (i,) + (0,) * (_nd - 1))
        for s in out_shapes
    )
    return pl.pallas_call(
        kernel,
        out_shape=tuple(out_shapes),
        grid_spec=pltpu.PrefetchScalarGridSpec(
            num_scalar_prefetch=0,
            grid=grid,
            in_specs=in_specs,
            out_specs=out_specs,
        ),
        compiler_params=_COMPILER_PARAMS,
    )(*[a for a, _ in inputs])


# ------------------------------- kernels ----------------------------------


def _rmsnorm_qkv_kernel(x_ref, nw_ref, wq_ref, wk_ref, wv_ref,
                        q_ref, k_ref, v_ref, *, eps):
    """RMSNorm (f32, rsqrt on the EUP) fused with the q/k/v projections."""
    x = x_ref[...].astype(jnp.float32)                              # (tm, D)
    inv_rms = lax.rsqrt(jnp.mean(x * x, axis=-1, keepdims=True) + eps)
    h = x * inv_rms * nw_ref[...].astype(jnp.float32)               # (tm, D)
    q_ref[...] = jnp.dot(h, wq_ref[...].astype(jnp.float32),
                         preferred_element_type=jnp.float32).astype(q_ref.dtype)
    k_ref[...] = jnp.dot(h, wk_ref[...].astype(jnp.float32),
                         preferred_element_type=jnp.float32).astype(k_ref.dtype)
    v_ref[...] = jnp.dot(h, wv_ref[...].astype(jnp.float32),
                         preferred_element_type=jnp.float32).astype(v_ref.dtype)


def _attention_kernel(cos_ref, sin_ref, q_ref, k_ref, v_ref, o_ref, *, scale):
    """Rotary embedding + the reference's per-position head attention.

    q: (tm, H, hd), k/v: (tm, Hkv, hd).  The reference repeat_interleaves k/v
    to H heads and softmaxes an (H, H) score matrix per row; attending over
    the Hkv heads directly is algebraically identical (the r identical
    columns cancel between softmax numerator and denominator), so we skip the
    repeat entirely (exact for attention_mask=None).
    """
    f32 = jnp.float32
    cos = cos_ref[...].astype(f32)[:, None, :]                      # (tm, 1, hd)
    sin = sin_ref[...].astype(f32)[:, None, :]
    q = q_ref[...].astype(f32)                                      # (tm, H, hd)
    k = k_ref[...].astype(f32)                                      # (tm, Hkv, hd)
    v = v_ref[...].astype(f32)

    half = q.shape[-1] // 2

    def rope(t):
        # rotate_half(t) = concat(-t2, t1) along the last (lane) axis.
        rot = jnp.concatenate([-t[..., half:], t[..., :half]], axis=-1)
        return t * cos + rot * sin

    q = rope(q)
    k = rope(k)

    s = jnp.einsum("nhd,nkd->nhk", q, k,
                   preferred_element_type=f32) * scale              # (tm, H, Hkv)
    s = s - jnp.max(s, axis=-1, keepdims=True)
    p = jnp.exp(s)
    p = p / jnp.sum(p, axis=-1, keepdims=True)
    ctx = jnp.einsum("nhk,nkd->nhd", p, v,
                     preferred_element_type=f32)                    # (tm, H, hd)
    o_ref[...] = ctx.astype(o_ref.dtype)


def _linear_residual_kernel(a_ref, w_ref, res_ref, o_ref):
    """out = residual + a @ W (projection fused with the residual add)."""
    acc = jnp.dot(a_ref[...].astype(jnp.float32),
                  w_ref[...].astype(jnp.float32),
                  preferred_element_type=jnp.float32)
    o_ref[...] = (res_ref[...].astype(jnp.float32) + acc).astype(o_ref.dtype)


def _rmsnorm_swiglu_kernel(x_ref, nw_ref, w1_ref, w2_ref, o_ref, *, eps):
    """RMSNorm fused with the FFN gate: silu(h @ w1) * (h @ w2)."""
    x = x_ref[...].astype(jnp.float32)
    inv_rms = lax.rsqrt(jnp.mean(x * x, axis=-1, keepdims=True) + eps)
    h = x * inv_rms * nw_ref[...].astype(jnp.float32)
    u = jnp.dot(h, w1_ref[...].astype(jnp.float32),
                preferred_element_type=jnp.float32)
    g = jnp.dot(h, w2_ref[...].astype(jnp.float32),
                preferred_element_type=jnp.float32)
    swish = u * (1.0 / (1.0 + jnp.exp(-u)))          # SiLU (exp -> EUP slot)
    o_ref[...] = (swish * g).astype(o_ref.dtype)


# ------------------------------- wrapper -----------------------------------


def transformer_block(x, params, attention_mask=None, *, eps=1e-6):
    """Forward pass of the reference TransformerBlock.

    Linear weights are stored transposed relative to nn.Linear, i.e. as
    (in_features, out_features) so the kernels compute x @ W directly.
    """
    if attention_mask is not None:
        # TODO(synk): masked_fill on the reference's [B, L, H, H] head-attention
        # scores is not implemented (the reference default is None).
        raise NotImplementedError("attention_mask is not supported")

    B, L, D = x.shape
    rows = B * L
    H = int(params["num_heads"])
    Hkv = int(params["num_kv_heads"])
    hd = int(params["head_dim"])

    wq, wk, wv, wo = params["wq"], params["wk"], params["wv"], params["wo"]
    w1, w2, w3 = params["w1"], params["w2"], params["w3"]
    n1w = params["norm1_weight"].reshape(1, D)
    n2w = params["norm2_weight"].reshape(1, D)
    nq, nk, nv = wq.shape[1], wk.shape[1], wv.shape[1]
    hf = w1.shape[1]

    # Rotary tables.  RotaryEmbedding produces angles [L, hd] broadcast over
    # batch and heads; we expand them to one row per (batch, position) so the
    # attention kernel consumes them with the same row tiling as q/k/v.
    # TODO(synk): the reference takes .real/.imag of a real tensor (a PyTorch
    # error); interpreted here as cos/sin of the angles (standard RoPE).
    t = jnp.arange(L, dtype=jnp.float32)
    inv_freq = 1.0 / (10000.0 ** (jnp.arange(0, hd, 2, dtype=jnp.float32) / hd))
    angles = jnp.outer(t, inv_freq)
    angles = jnp.concatenate([angles, angles], axis=-1)             # (L, hd)
    cos_rows = jnp.tile(jnp.cos(angles), (B, 1))                    # (rows, hd)
    sin_rows = jnp.tile(jnp.sin(angles), (B, 1))

    x2d = x.reshape(rows, D)

    # One row tile for the whole pipeline, sized from the widest kernel's
    # per-row activation footprint (double-buffered input + output streams).
    widest_cols = max(D + nq + nk + nv,                 # rmsnorm + qkv
                      2 * hd + (2 * H + 2 * Hkv) * hd,  # cos,sin,q,k,v,out
                      nq + 2 * D,                       # o_proj + residual
                      D + hf,                           # rmsnorm + swiglu gate
                      hf + 2 * D)                       # w3 + residual
    bytes_per_row = 2 * widest_cols * x.dtype.itemsize
    row_tile = _choose_row_tile(rows, bytes_per_row)

    # 1) fused RMSNorm + q/k/v projections.
    q2d, k2d, v2d = _row_blocked_call(
        functools.partial(_rmsnorm_qkv_kernel, eps=eps),
        rows=rows, row_tile=row_tile,
        inputs=[(x2d, True), (n1w, False), (wq, False), (wk, False), (wv, False)],
        out_shapes=(jax.ShapeDtypeStruct((rows, nq), x.dtype),
                    jax.ShapeDtypeStruct((rows, nk), x.dtype),
                    jax.ShapeDtypeStruct((rows, nv), x.dtype)))

    q3 = q2d.reshape(rows, H, hd)
    k3 = k2d.reshape(rows, Hkv, hd)
    v3 = v2d.reshape(rows, Hkv, hd)

    # 2) rotary embedding + per-position grouped head attention.
    #    (Attention dropout is identity in eval mode.)
    (ctx3,) = _row_blocked_call(
        functools.partial(_attention_kernel, scale=hd ** -0.5),
        rows=rows, row_tile=row_tile,
        inputs=[(cos_rows, True), (sin_rows, True),
                (q3, True), (k3, True), (v3, True)],
        out_shapes=(jax.ShapeDtypeStruct((rows, H, hd), x.dtype),))

    # 3) output projection fused with the first residual add.
    ctx2d = ctx3.reshape(rows, H * hd)
    (x1,) = _row_blocked_call(
        _linear_residual_kernel,
        rows=rows, row_tile=row_tile,
        inputs=[(ctx2d, True), (wo, False), (x2d, True)],
        out_shapes=(jax.ShapeDtypeStruct((rows, D), x.dtype),))

    # 4) fused RMSNorm + SwiGLU gate.  (FFN dropout is identity in eval mode.)
    (hid,) = _row_blocked_call(
        functools.partial(_rmsnorm_swiglu_kernel, eps=eps),
        rows=rows, row_tile=row_tile,
        inputs=[(x1, True), (n2w, False), (w1, False), (w2, False)],
        out_shapes=(jax.ShapeDtypeStruct((rows, hf), x.dtype),))

    # 5) down projection fused with the second residual add.
    (out2d,) = _row_blocked_call(
        _linear_residual_kernel,
        rows=rows, row_tile=row_tile,
        inputs=[(hid, True), (w3, False), (x1, True)],
        out_shapes=(jax.ShapeDtypeStruct((rows, D), x.dtype),))

    return out2d.reshape(B, L, D)


# ------------------------- pure-JAX reference -------------------------------


def _rotate_half(x):
    half = x.shape[-1] // 2
    return jnp.concatenate([-x[..., half:], x[..., :half]], axis=-1)


def transformer_block_ref(x, params, eps=1e-6):
    """Pure-JAX transcription of the PyTorch forward (literal [B,L,H,H]
    per-position head attention, with the explicit kv-head repeat)."""
    B, L, D = x.shape
    H = int(params["num_heads"])
    Hkv = int(params["num_kv_heads"])
    hd = int(params["head_dim"])

    def rmsnorm(v, w):
        rms = jnp.sqrt(jnp.mean(v * v, axis=-1, keepdims=True) + eps)
        return w * (v / rms)

    h = rmsnorm(x, params["norm1_weight"])
    q = (h @ params["wq"]).reshape(B, L, H, hd)
    k = (h @ params["wk"]).reshape(B, L, Hkv, hd)
    v = (h @ params["wv"]).reshape(B, L, Hkv, hd)

    t = jnp.arange(L, dtype=jnp.float32)
    inv_freq = 1.0 / (10000.0 ** (jnp.arange(0, hd, 2, dtype=jnp.float32) / hd))
    angles = jnp.outer(t, inv_freq)
    angles = jnp.concatenate([angles, angles], axis=-1)[None, :, None, :]
    cos, sin = jnp.cos(angles), jnp.sin(angles)
    q = q * cos + _rotate_half(q) * sin
    k = k * cos + _rotate_half(k) * sin

    rep = H // Hkv
    k = jnp.repeat(k, rep, axis=2)
    v = jnp.repeat(v, rep, axis=2)
    attn = jnp.einsum("blhd,blgd->blhg", q, k) * (hd ** -0.5)
    attn = jax.nn.softmax(attn, axis=-1)
    ctx = jnp.einsum("blhg,blgd->blhd", attn, v).reshape(B, L, H * hd)
    x = x + ctx @ params["wo"]

    h2 = rmsnorm(x, params["norm2_weight"])
    ffn = (jax.nn.silu(h2 @ params["w1"]) * (h2 @ params["w2"])) @ params["w3"]
    return x + ffn


if __name__ == "__main__":
    key = jax.random.PRNGKey(0)
    B, L = 2, 8
    dim, num_heads, ffn_dim = 128, 8, 256
    num_kv_heads, head_dim = 2, 64        # GroupedQueryAttention defaults

    ks = jax.random.split(key, 8)

    def init(k, shape):
        fan_in = shape[0]
        return jax.random.normal(k, shape, dtype=jnp.float32) / jnp.sqrt(fan_in)

    params = {
        "num_heads": num_heads, "num_kv_heads": num_kv_heads, "head_dim": head_dim,
        # RMSNorm: nn.Parameter(torch.ones(dim)).
        "norm1_weight": jnp.ones((dim,), jnp.float32),
        "norm2_weight": jnp.ones((dim,), jnp.float32),
        # nn.Linear weights, stored transposed as (in_features, out_features).
        "wq": init(ks[0], (dim, num_heads * head_dim)),
        "wk": init(ks[1], (dim, num_kv_heads * head_dim)),
        "wv": init(ks[2], (dim, num_kv_heads * head_dim)),
        "wo": init(ks[3], (num_heads * head_dim, dim)),
        "w1": init(ks[4], (dim, ffn_dim)),
        "w2": init(ks[5], (dim, ffn_dim)),
        "w3": init(ks[6], (ffn_dim, dim)),
    }
    x = jax.random.normal(ks[7], (B, L, dim), dtype=jnp.float32)

    out = transformer_block(x, params)
    out = jax.block_until_ready(out)

    ref = transformer_block_ref(x, params)
    assert out.shape == x.shape
    # Tolerance covers possible MXU default-precision (bf16-pass) differences
    # between the in-kernel dots and the XLA reference einsums.
    assert jnp.allclose(out, ref, atol=5e-2, rtol=5e-2), (
        f"mismatch vs reference: max abs err {jnp.max(jnp.abs(out - ref))}")

    print("KERNEL_OK")
</pallas_src>

<mosaic_0001>
module attributes {stable_mosaic.version = 11 : i64} {
  func.func @_rmsnorm_qkv_kernel(%arg0: i32, %arg1: memref<8x128xf32, #tpu.memory_space<vmem>>, %arg2: memref<1x128xf32, #tpu.memory_space<vmem>>, %arg3: memref<128x512xf32, #tpu.memory_space<vmem>>, %arg4: memref<128x128xf32, #tpu.memory_space<vmem>>, %arg5: memref<128x128xf32, #tpu.memory_space<vmem>>, %arg6: memref<8x512xf32, #tpu.memory_space<vmem>>, %arg7: memref<8x128xf32, #tpu.memory_space<vmem>>, %arg8: memref<8x128xf32, #tpu.memory_space<vmem>>) attributes {dimension_semantics = [#tpu.dimension_semantics<parallel>], iteration_bounds = array<i64: 2>, scalar_prefetch = 0 : i64, scratch_operands = 0 : i64, tpu.core_type = #tpu.core_type<tc>, window_params = [{transform_indices = @transform_0, window_bounds = array<i64: 8, 128>}, {pipeline_mode = #tpu.pipeline_mode<synchronous>, transform_indices = @transform_1, window_bounds = array<i64: 1, 128>}, {pipeline_mode = #tpu.pipeline_mode<synchronous>, transform_indices = @transform_2, window_bounds = array<i64: 128, 512>}, {pipeline_mode = #tpu.pipeline_mode<synchronous>, transform_indices = @transform_3, window_bounds = array<i64: 128, 128>}, {pipeline_mode = #tpu.pipeline_mode<synchronous>, transform_indices = @transform_4, window_bounds = array<i64: 128, 128>}, {transform_indices = @transform_5, window_bounds = array<i64: 8, 512>}, {transform_indices = @transform_6, window_bounds = array<i64: 8, 128>}, {transform_indices = @transform_7, window_bounds = array<i64: 8, 128>}]} {
    %c0 = arith.constant 0 : index
    %c0_0 = arith.constant 0 : index
    %0 = vector.load %arg1[%c0, %c0_0] : memref<8x128xf32, #tpu.memory_space<vmem>>, vector<8x128xf32>
    %1 = arith.mulf %0, %0 : vector<8x128xf32>
    %cst = arith.constant dense<0.000000e+00> : vector<8xf32>
    %2 = vector.multi_reduction <add>, %1, %cst [1] : vector<8x128xf32> to vector<8xf32>
    %3 = vector.shape_cast %2 : vector<8xf32> to vector<8x1xf32>
    %cst_1 = arith.constant 1.280000e+02 : f32
    %4 = vector.broadcast %cst_1 : f32 to vector<8x1xf32>
    %5 = arith.divf %3, %4 : vector<8x1xf32>
    %cst_2 = arith.constant 9.99999997E-7 : f32
    %6 = vector.broadcast %cst_2 : f32 to vector<8x1xf32>
    %7 = arith.addf %5, %6 : vector<8x1xf32>
    %8 = math.rsqrt %7 : vector<8x1xf32>
    %9 = vector.broadcast %8 : vector<8x1xf32> to vector<8x128xf32>
    %10 = arith.mulf %0, %9 : vector<8x128xf32>
    %c0_3 = arith.constant 0 : index
    %c0_4 = arith.constant 0 : index
    %11 = vector.load %arg2[%c0_3, %c0_4] : memref<1x128xf32, #tpu.memory_space<vmem>>, vector<1x128xf32>
    %12 = vector.broadcast %11 : vector<1x128xf32> to vector<8x128xf32>
    %13 = arith.mulf %10, %12 : vector<8x128xf32>
    %c0_5 = arith.constant 0 : index
    %c0_6 = arith.constant 0 : index
    %14 = vector.load %arg3[%c0_5, %c0_6] : memref<128x512xf32, #tpu.memory_space<vmem>>, vector<128x512xf32>
    %cst_7 = arith.constant dense<0.000000e+00> : vector<8x512xf32>
    %15 = tpu.matmul %13, %14, %cst_7 {dimension_numbers = #tpu.dot_dimension_numbers<[1], [0], [0], [1], [0, 0, 1, 1], [], []>} : vector<8x128xf32>, vector<128x512xf32>, vector<8x512xf32> -> vector<8x512xf32>
    %c0_8 = arith.constant 0 : index
    %c0_9 = arith.constant 0 : index
    %16 = vector.load %arg6[%c0_8, %c0_9] : memref<8x512xf32, #tpu.memory_space<vmem>>, vector<8x512xf32>
    tpu.vector_store %arg6[%c0_8, %c0_9], %15 {strides = array<i32>} : memref<8x512xf32, #tpu.memory_space<vmem>>, vector<8x512xf32>,
    %c0_10 = arith.constant 0 : index
    %c0_11 = arith.constant 0 : index
    %17 = vector.load %arg4[%c0_10, %c0_11] : memref<128x128xf32, #tpu.memory_space<vmem>>, vector<128x128xf32>
    %cst_12 = arith.constant dense<0.000000e+00> : vector<8x128xf32>
    %18 = tpu.matmul %13, %17, %cst_12 {dimension_numbers = #tpu.dot_dimension_numbers<[1], [0], [0], [1], [0, 0, 1, 1], [], []>} : vector<8x128xf32>, vector<128x128xf32>, vector<8x128xf32> -> vector<8x128xf32>
    %c0_13 = arith.constant 0 : index
    %c0_14 = arith.constant 0 : index
    %19 = vector.load %arg7[%c0_13, %c0_14] : memref<8x128xf32, #tpu.memory_space<vmem>>, vector<8x128xf32>
    tpu.vector_store %arg7[%c0_13, %c0_14], %18 {strides = array<i32>} : memref<8x128xf32, #tpu.memory_space<vmem>>, vector<8x128xf32>,
    %c0_15 = arith.constant 0 : index
    %c0_16 = arith.constant 0 : index
    %20 = vector.load %arg5[%c0_15, %c0_16] : memref<128x128xf32, #tpu.memory_space<vmem>>, vector<128x128xf32>
    %cst_17 = arith.constant dense<0.000000e+00> : vector<8x128xf32>
    %21 = tpu.matmul %13, %20, %cst_17 {dimension_numbers = #tpu.dot_dimension_numbers<[1], [0], [0], [1], [0, 0, 1, 1], [], []>} : vector<8x128xf32>, vector<128x128xf32>, vector<8x128xf32> -> vector<8x128xf32>
    %c0_18 = arith.constant 0 : index
    %c0_19 = arith.constant 0 : index
    %22 = vector.load %arg8[%c0_18, %c0_19] : memref<8x128xf32, #tpu.memory_space<vmem>>, vector<8x128xf32>
    tpu.vector_store %arg8[%c0_18, %c0_19], %21 {strides = array<i32>} : memref<8x128xf32, #tpu.memory_space<vmem>>, vector<8x128xf32>,
    return
  }
  func.func @transform_0(%arg0: i32) -> (i32, i32) {
    %c0_i32 = arith.constant 0 : i32
    %c0_i32_0 = arith.constant 0 : i32
    return %arg0, %c0_i32 : i32, i32
  }
  func.func @transform_1(%arg0: i32) -> (i32, i32) {
    %c0_i32 = arith.constant 0 : i32
    %c0_i32_0 = arith.constant 0 : i32
    %c0_i32_1 = arith.constant 0 : i32
    return %c0_i32, %c0_i32_0 : i32, i32
  }
  func.func @transform_2(%arg0: i32) -> (i32, i32) {
    %c0_i32 = arith.constant 0 : i32
    %c0_i32_0 = arith.constant 0 : i32
    %c0_i32_1 = arith.constant 0 : i32
    return %c0_i32, %c0_i32_0 : i32, i32
  }
  func.func @transform_3(%arg0: i32) -> (i32, i32) {
    %c0_i32 = arith.constant 0 : i32
    %c0_i32_0 = arith.constant 0 : i32
    %c0_i32_1 = arith.constant 0 : i32
    return %c0_i32, %c0_i32_0 : i32, i32
  }
  func.func @transform_4(%arg0: i32) -> (i32, i32) {
    %c0_i32 = arith.constant 0 : i32
    %c0_i32_0 = arith.constant 0 : i32
    %c0_i32_1 = arith.constant 0 : i32
    return %c0_i32, %c0_i32_0 : i32, i32
  }
  func.func @transform_5(%arg0: i32) -> (i32, i32) {
    %c0_i32 = arith.constant 0 : i32
    %c0_i32_0 = arith.constant 0 : i32
    return %arg0, %c0_i32 : i32, i32
  }
  func.func @transform_6(%arg0: i32) -> (i32, i32) {
    %c0_i32 = arith.constant 0 : i32
    %c0_i32_0 = arith.constant 0 : i32
    return %arg0, %c0_i32 : i32, i32
  }
  func.func @transform_7(%arg0: i32) -> (i32, i32) {
    %c0_i32 = arith.constant 0 : i32
    %c0_i32_0 = arith.constant 0 : i32
    return %arg0, %c0_i32 : i32, i32
  }
}

</mosaic_0001>

<llo_original>
// kernel: tpu_custom_call.1
$region0: #{tpu_custom_call.1}
  #allocation0 [shape = 'u32[]', space=smem, size = 0x4, offset = 0x4, fixed_abs, tag = 'smem constant byte address 0x4 - core index']
  #allocation1 [shape = 'u32[144,128]{1,0:T(1,128)}', space=vmem, size = 0x12000, scoped, tag = 'internal scratch']
  %s0 = inlined_call_operand.hbm [shape: f32[16,128], index: 0, kind: input, shape index: {}]
  %s1 = inlined_call_operand.vmem [shape: f32[1,128], index: 1, kind: input, shape index: {}]
  %s2 = inlined_call_operand.hbm [shape: f32[128,512], index: 2, kind: input, shape index: {}]
  %s3 = inlined_call_operand.hbm [shape: f32[128,128], index: 3, kind: input, shape index: {}]
  %s4 = inlined_call_operand.hbm [shape: f32[128,128], index: 4, kind: input, shape index: {}]
  %s5 = inlined_call_operand.hbm [shape: f32[16,512], index: 5, kind: output, shape index: {0}]
  %s6 = inlined_call_operand.hbm [shape: f32[16,128], index: 6, kind: output, shape index: {1}]
  %s7 = inlined_call_operand.hbm [shape: f32[16,128], index: 7, kind: output, shape index: {2}]
  %8 = xla_tuple %s5, %s6, %s7
  %s9 = sld [smem:[#allocation0]]
  $region85: #{tpu_custom_call.1} parent=0
    _
  %s11 = ssub.s32 1, %s9
  %s12 = scalar_select 0, %s11, %s9
  $region1: #{tpu_custom_call.1} parent=0
    #allocation2 [shape = 'u8[8192]{0}', space=vmem, size = 0x2000, scoped, tag = 'input window, operand 0']
    #allocation3 [shape = 's32[2]{0}', space=sflag, size = 0x8, scoped, tag = 'scoped memory for tpu_custom_call.1']
    #allocation4 [shape = 's32[2]{0}', space=sflag, size = 0x8, scoped, tag = 'scoped memory for tpu_custom_call.1']
    #allocation5 [shape = 'u8[262144]{0}', space=vmem, size = 0x40000, scoped, tag = 'input window, operand 2, single buffered']
    #allocation6 [shape = 's32[1]{0}', space=sflag, size = 0x4, scoped, tag = 'scoped memory for tpu_custom_call.1']
    #allocation7 [shape = 'u8[65536]{0}', space=vmem, size = 0x10000, scoped, tag = 'input window, operand 3, single buffered']
    #allocation8 [shape = 'u8[65536]{0}', space=vmem, size = 0x10000, scoped, tag = 'input window, operand 4, single buffered']
    #allocation9 [shape = 's32[1]{0}', space=sflag, size = 0x4, scoped, tag = 'scoped memory for tpu_custom_call.1']
    #allocation10 [shape = 'u8[32768]{0}', space=vmem, size = 0x8000, scoped, tag = 'output window, operand 0']
    #allocation11 [shape = 'u8[8192]{0}', space=vmem, size = 0x2000, scoped, tag = 'output window, operand 1']
    #allocation12 [shape = 's32[2]{0}', space=sflag, size = 0x8, scoped, tag = 'scoped memory for tpu_custom_call.1']
    #allocation13 [shape = 'u8[8192]{0}', space=vmem, size = 0x2000, scoped, tag = 'output window, operand 2']
    %13 = vsyncpa [#allocation3], 0
    %s14 = scalar_lea.sflag [#allocation3], 1
    %15 = vsyncpa %s14, 0
    %16 = vsyncpa [#allocation6], 0
    %17 = vsyncpa [#allocation9], 0
    %18 = vsyncpa [#allocation4], 0
    %s19 = scalar_lea.sflag [#allocation4], 1
    %20 = vsyncpa %s19, 0
    %21 = vsyncpa [#allocation12], 0
    %s22 = scalar_lea.sflag [#allocation12], 1
    %23 = vsyncpa %s22, 0
    loop: start=0, step=1, limit=4
    $region2: #{tpu_custom_call.1} parent=1 // loop_pre_header
      _
    $region3: #{tpu_custom_call.1} parent=1 // loop_header
      %s25 = sphi 0, %s29
      %p26 = scmp.ge.s32.totalorder %s25, 4
      %s35 = sphi 0, %s37
      %s38 = sphi 0, %s35
      %s39 = sphi 0, %s38
      %s55 = sphi 0, %s39
      %s59 = sphi 0, %s59
      %s61 = sphi 0, %s59
      %s62 = sphi 0, %s61
      %s76 = sphi 0, %s62
      %s80 = sphi 0, %s80
      %s82 = sphi 0, %s80
      %s83 = sphi 0, %s82
      %s97 = sphi 0, %s83
      %s101 = sphi 0, %s101
      %s103 = sphi 0, %s101
      %s104 = sphi 0, %s103
      %s118 = sphi 0, %s104
      %s122 = sphi 0, %s122
      %s124 = sphi 0, %s122
      %s125 = sphi 0, %s124
      %s139 = sphi 0, %s125
      %s145 = sphi 0, %s147
      %s148 = sphi 0, %s145
      %s149 = sphi 0, %s148
      %s165 = sphi 0, %s149
      %s171 = sphi 0, %s173
      %s174 = sphi 0, %s171
      %s175 = sphi 0, %s174
      %s191 = sphi 0, %s175
      %s197 = sphi 0, %s199
      %s200 = sphi 0, %s197
      %s201 = sphi 0, %s200
      %s217 = sphi 0, %s201
    $region4: #{tpu_custom_call.1} parent=1 // loop_header_branch
      %28 = sbr.rel (%p26) target = $region8
    $region5: #{tpu_custom_call.1} parent=1 // loop_body
      %s30 = ssub.s32 %s25, 1
      %s31 = ssub.s32 %s25, 2
      %s32 = sadd.s32 %s25, 1
      %s33 = ssub.s32 %s25, %s32
      %p34 = scmp.eq.s32.totalorder %s33, 0
      %s36 = sadd.s32 %s35, 1
      %s37 = scalar_select %p34, %s35, %s36
      %p40 = pneg %p34
      %p41 = scmp.eq.s32.totalorder %s25, 1
      %p42 = por %p40, %p41
      %p43 = scmp.ne.s32.totalorder %s35, %s38
      %p44 = scmp.eq.s32.totalorder %s25, 0
      %p45 = por %p43, %p44
      %p46 = scmp.ne.s32.totalorder %s35, %s38
      %p47 = scmp.eq.s32.totalorder %s30, 1
      %p48 = por %p46, %p47
      %p49 = scmp.ne.s32.totalorder %s38, %s39
      %p50 = scmp.eq.s32.totalorder %s30, 0
      %p51 = por %p49, %p50
      %p52 = scmp.ne.s32.totalorder %s38, %s39
      %p53 = scmp.eq.s32.totalorder %s31, 1
      %p54 = por %p52, %p53
      %p56 = scmp.ne.s32.totalorder %s39, %s55
      %p57 = scmp.eq.s32.totalorder %s31, 0
      %p58 = por %p56, %p57
      %s60 = sadd.s32 %s59, 1
      %p63 = scmp.eq.s32.totalorder %s25, 1
      %p64 = scmp.ne.s32.totalorder %s59, %s61
      %p65 = scmp.eq.s32.totalorder %s25, 0
      %p66 = por %p64, %p65
      %p67 = scmp.ne.s32.totalorder %s59, %s61
      %p68 = scmp.eq.s32.totalorder %s30, 1
      %p69 = por %p67, %p68
      %p70 = scmp.ne.s32.totalorder %s61, %s62
      %p71 = scmp.eq.s32.totalorder %s30, 0
      %p72 = por %p70, %p71
      %p73 = scmp.ne.s32.totalorder %s61, %s62
      %p74 = scmp.eq.s32.totalorder %s31, 1
      %p75 = por %p73, %p74
      %p77 = scmp.ne.s32.totalorder %s62, %s76
      %p78 = scmp.eq.s32.totalorder %s31, 0
      %p79 = por %p77, %p78
      %s81 = sadd.s32 %s80, 1
      %p84 = scmp.eq.s32.totalorder %s25, 1
      %p85 = scmp.ne.s32.totalorder %s80, %s82
      %p86 = scmp.eq.s32.totalorder %s25, 0
      %p87 = por %p85, %p86
      %p88 = scmp.ne.s32.totalorder %s80, %s82
      %p89 = scmp.eq.s32.totalorder %s30, 1
      %p90 = por %p88, %p89
      %p91 = scmp.ne.s32.totalorder %s82, %s83
      %p92 = scmp.eq.s32.totalorder %s30, 0
      %p93 = por %p91, %p92
      %p94 = scmp.ne.s32.totalorder %s82, %s83
      %p95 = scmp.eq.s32.totalorder %s31, 1
      %p96 = por %p94, %p95
      %p98 = scmp.ne.s32.totalorder %s83, %s97
      %p99 = scmp.eq.s32.totalorder %s31, 0
      %p100 = por %p98, %p99
      %s102 = sadd.s32 %s101, 1
      %p105 = scmp.eq.s32.totalorder %s25, 1
      %p106 = scmp.ne.s32.totalorder %s101, %s103
      %p107 = scmp.eq.s32.totalorder %s25, 0
      %p108 = por %p106, %p107
      %p109 = scmp.ne.s32.totalorder %s101, %s103
      %p110 = scmp.eq.s32.totalorder %s30, 1
      %p111 = por %p109, %p110
      %p112 = scmp.ne.s32.totalorder %s103, %s104
      %p113 = scmp.eq.s32.totalorder %s30, 0
      %p114 = por %p112, %p113
      %p115 = scmp.ne.s32.totalorder %s103, %s104
      %p116 = scmp.eq.s32.totalorder %s31, 1
      %p117 = por %p115, %p116
      %p119 = scmp.ne.s32.totalorder %s104, %s118
      %p120 = scmp.eq.s32.totalorder %s31, 0
      %p121 = por %p119, %p120
      %s123 = sadd.s32 %s122, 1
      %p126 = scmp.eq.s32.totalorder %s25, 1
      %p127 = scmp.ne.s32.totalorder %s122, %s124
      %p128 = scmp.eq.s32.totalorder %s25, 0
      %p129 = por %p127, %p128
      %p130 = scmp.ne.s32.totalorder %s122, %s124
      %p131 = scmp.eq.s32.totalorder %s30, 1
      %p132 = por %p130, %p131
      %p133 = scmp.ne.s32.totalorder %s124, %s125
      %p134 = scmp.eq.s32.totalorder %s30, 0
      %p135 = por %p133, %p134
      %p136 = scmp.ne.s32.totalorder %s124, %s125
      %p137 = scmp.eq.s32.totalorder %s31, 1
      %p138 = por %p136, %p137
      %p140 = scmp.ne.s32.totalorder %s125, %s139
      %p141 = scmp.eq.s32.totalorder %s31, 0
      %p142 = por %p140, %p141
      %s143 = ssub.s32 %s25, %s32
      %p144 = scmp.eq.s32.totalorder %s143, 0
      %s146 = sadd.s32 %s145, 1
      %s147 = scalar_select %p144, %s145, %s146
      %p150 = pneg %p144
      %p151 = scmp.eq.s32.totalorder %s25, 1
      %p152 = por %p150, %p151
      %p153 = scmp.ne.s32.totalorder %s145, %s148
      %p154 = scmp.eq.s32.totalorder %s25, 0
      %p155 = por %p153, %p154
      %p156 = scmp.ne.s32.totalorder %s145, %s148
      %p157 = scmp.eq.s32.totalorder %s30, 1
      %p158 = por %p156, %p157
      %p159 = scmp.ne.s32.totalorder %s148, %s149
      %p160 = scmp.eq.s32.totalorder %s30, 0
      %p161 = por %p159, %p160
      %p162 = scmp.ne.s32.totalorder %s148, %s149
      %p163 = scmp.eq.s32.totalorder %s31, 1
      %p164 = por %p162, %p163
      %p166 = scmp.ne.s32.totalorder %s149, %s165
      %p167 = scmp.eq.s32.totalorder %s31, 0
      %p168 = por %p166, %p167
      %s169 = ssub.s32 %s25, %s32
      %p170 = scmp.eq.s32.totalorder %s169, 0
      %s172 = sadd.s32 %s171, 1
      %s173 = scalar_select %p170, %s171, %s172
      %p176 = pneg %p170
      %p177 = scmp.eq.s32.totalorder %s25, 1
      %p178 = por %p176, %p177
      %p179 = scmp.ne.s32.totalorder %s171, %s174
      %p180 = scmp.eq.s32.totalorder %s25, 0
      %p181 = por %p179, %p180
      %p182 = scmp.ne.s32.totalorder %s171, %s174
      %p183 = scmp.eq.s32.totalorder %s30, 1
      %p184 = por %p182, %p183
      %p185 = scmp.ne.s32.totalorder %s174, %s175
      %p186 = scmp.eq.s32.totalorder %s30, 0
      %p187 = por %p185, %p186
      %p188 = scmp.ne.s32.totalorder %s174, %s175
      %p189 = scmp.eq.s32.totalorder %s31, 1
      %p190 = por %p188, %p189
      %p192 = scmp.ne.s32.totalorder %s175, %s191
      %p193 = scmp.eq.s32.totalorder %s31, 0
      %p194 = por %p192, %p193
      %s195 = ssub.s32 %s25, %s32
      %p196 = scmp.eq.s32.totalorder %s195, 0
      %s198 = sadd.s32 %s197, 1
      %s199 = scalar_select %p196, %s197, %s198
      %p202 = pneg %p196
      %p203 = scmp.eq.s32.totalorder %s25, 1
      %p204 = por %p202, %p203
      %p205 = scmp.ne.s32.totalorder %s197, %s200
      %p206 = scmp.eq.s32.totalorder %s25, 0
      %p207 = por %p205, %p206
      %p208 = scmp.ne.s32.totalorder %s197, %s200
      %p209 = scmp.eq.s32.totalorder %s30, 1
      %p210 = por %p208, %p209
      %p211 = scmp.ne.s32.totalorder %s200, %s201
      %p212 = scmp.eq.s32.totalorder %s30, 0
      %p213 = por %p211, %p212
      %p214 = scmp.ne.s32.totalorder %s200, %s201
      %p215 = scmp.eq.s32.totalorder %s31, 1
      %p216 = por %p214, %p215
      %p218 = scmp.ne.s32.totalorder %s201, %s217
      %p219 = scmp.eq.s32.totalorder %s31, 0
      %p220 = por %p218, %p219
      %p221 = scmp.le.s32.totalorder 1, %s25
      %p222 = scmp.lt.s32.totalorder %s25, 3
      %p223 = pnand %p221, %p222
      %p224 = pneg %p223
      // Predicated region
      $region9: #{tpu_custom_call.1} parent=5 // pred_check
        _
      $region10: #{tpu_custom_call.1} parent=5 // pred_check_branch
        %226 = sbr.rel (%p223) target = $region12
      $region11: #{tpu_custom_call.1} parent=5 // pred_region
        %s227 = ssub.s32 %s25, 1
        // Predicated region
        $region13: #{tpu_custom_call.1} parent=11 // pred_check
          %p228 = pneg %p72
        $region14: #{tpu_custom_call.1} parent=11 // pred_check_branch
          %230 = sbr.rel (%p228) target = $region16
        $region15: #{tpu_custom_call.1} parent=11 // pred_region
          _
        $region16: #{tpu_custom_call.1} parent=11 // pred_fallthru
          _
        // Predicated region
        $region17: #{tpu_custom_call.1} parent=11 // pred_check
          %p231 = pneg %p93
        $region18: #{tpu_custom_call.1} parent=11 // pred_check_branch
          %233 = sbr.rel (%p231) target = $region20
        $region19: #{tpu_custom_call.1} parent=11 // pred_region
          %s235 = ssub.s32 8192, 8192
          %236 = vsyncadd [#allocation6], %s235
          %s237 = sshll.u32 [#allocation5], 4
          %s238 = int_to_ptr.vmem [resolvable:$true] %s237
          %243 = dma.hbm_to_vmem [thread:$0]  %s2, 8192, %s238, [#allocation6], 512, 512, 32
        $region20: #{tpu_custom_call.1} parent=11 // pred_fallthru
          _
        // Predicated region
        $region21: #{tpu_custom_call.1} parent=11 // pred_check
          %p244 = pneg %p114
        $region22: #{tpu_custom_call.1} parent=11 // pred_check_branch
          %246 = sbr.rel (%p244) target = $region24
        $region23: #{tpu_custom_call.1} parent=11 // pred_region
          %s248 = ssub.s32 2048, 2048
          %249 = vsyncadd [#allocation6], %s248
          %s250 = sshll.u32 [#allocation7], 4
          %s251 = int_to_ptr.vmem [resolvable:$true] %s250
          %256 = dma.hbm_to_vmem [thread:$0]  %s3, 2048, %s251, [#allocation6], 128, 128, 8
        $region24: #{tpu_custom_call.1} parent=11 // pred_fallthru
          _
        // Predicated region
        $region25: #{tpu_custom_call.1} parent=11 // pred_check
          %p257 = pneg %p135
        $region26: #{tpu_custom_call.1} parent=11 // pred_check_branch
          %259 = sbr.rel (%p257) target = $region28
        $region27: #{tpu_custom_call.1} parent=11 // pred_region
          %s261 = ssub.s32 2048, 2048
          %262 = vsyncadd [#allocation9], %s261
          %s263 = sshll.u32 [#allocation8], 4
          %s264 = int_to_ptr.vmem [resolvable:$true] %s263
          %269 = dma.hbm_to_vmem [thread:$0]  %s4, 2048, %s264, [#allocation9], 128, 128, 8
        $region28: #{tpu_custom_call.1} parent=11 // pred_fallthru
          _
      $region12: #{tpu_custom_call.1} parent=5 // pred_fallthru
        _
      %p270 = scmp.lt.s32.totalorder %s25, 2
      // Predicated region
      $region29: #{tpu_custom_call.1} parent=5 // pred_check
        %p271 = pneg %p270
      $region30: #{tpu_custom_call.1} parent=5 // pred_check_branch
        %273 = sbr.rel (%p271) target = $region32
      $region31: #{tpu_custom_call.1} parent=5 // pred_region
        // Predicated region
        $region33: #{tpu_custom_call.1} parent=31 // pred_check
          %p274 = pneg %p45
        $region34: #{tpu_custom_call.1} parent=31 // pred_check_branch
          %276 = sbr.rel (%p274) target = $region36
        $region35: #{tpu_custom_call.1} parent=31 // pred_region
          %s277 = sand.u32 %s35, 1
          %s278 = scalar_lea.sflag [#allocation3], %s277
          %s279 = sand.u32 %s35, 1
          %s280 = smul.addr %s279, 8
          %s281 = scalar_lea.vmem [#allocation2], %s280
          %s283 = ssub.s32 128, 128
          %284 = vsyncadd %s278, %s283
          %s285 = smul.addr %s25, 128
          %s286 = scalar_lea.hbm %s0, %s285
          %s288 = sshll.u32 %s281, 4
          %s289 = int_to_ptr.vmem [resolvable:$true] %s288
          %291 = dma.hbm_to_vmem [thread:$0]  %s286, 128, %s289, %s278
        $region36: #{tpu_custom_call.1} parent=31 // pred_fallthru
          _
      $region32: #{tpu_custom_call.1} parent=5 // pred_fallthru
        _
      %p292 = scmp.le.s32.totalorder 1, %s25
      %p293 = scmp.lt.s32.totalorder %s25, 3
      %p294 = pnand %p292, %p293
      %p295 = pneg %p294
      // Predicated region
      $region37: #{tpu_custom_call.1} parent=5 // pred_check
        _
      $region38: #{tpu_custom_call.1} parent=5 // pred_check_branch
        %297 = sbr.rel (%p294) target = $region40
      $region39: #{tpu_custom_call.1} parent=5 // pred_region
        %s298 = ssub.s32 %s25, 1
        %s299 = sand.u32 %s38, 1
        %s300 = scalar_lea.sflag [#allocation3], %s299
        %s301 = sand.u32 %s38, 1
        %s302 = smul.addr %s301, 8
        %s303 = scalar_lea.vmem [#allocation2], %s302
        // Predicated region
        $region41: #{tpu_custom_call.1} parent=39 // pred_check
          %p304 = pneg %p51
        $region42: #{tpu_custom_call.1} parent=39 // pred_check_branch
          %306 = sbr.rel (%p304) target = $region44
        $region43: #{tpu_custom_call.1} parent=39 // pred_region
          %307 = dma.done %s300, 128
        $region44: #{tpu_custom_call.1} parent=39 // pred_fallthru
          _
        // Predicated region
        $region45: #{tpu_custom_call.1} parent=39 // pred_check
          %p308 = pneg %p93
        $region46: #{tpu_custom_call.1} parent=39 // pred_check_branch
          %310 = sbr.rel (%p308) target = $region48
        $region47: #{tpu_custom_call.1} parent=39 // pred_region
          %311 = dma.done [#allocation6], 8192
        $region48: #{tpu_custom_call.1} parent=39 // pred_fallthru
          _
        // Predicated region
        $region49: #{tpu_custom_call.1} parent=39 // pred_check
          %p312 = pneg %p114
        $region50: #{tpu_custom_call.1} parent=39 // pred_check_branch
          %314 = sbr.rel (%p312) target = $region52
        $region51: #{tpu_custom_call.1} parent=39 // pred_region
          %315 = dma.done [#allocation6], 2048
        $region52: #{tpu_custom_call.1} parent=39 // pred_fallthru
          _
        // Predicated region
        $region53: #{tpu_custom_call.1} parent=39 // pred_check
          %p316 = pneg %p135
        $region54: #{tpu_custom_call.1} parent=39 // pred_check_branch
          %318 = sbr.rel (%p316) target = $region56
        $region55: #{tpu_custom_call.1} parent=39 // pred_region
          %319 = dma.done [#allocation9], 2048
        $region56: #{tpu_custom_call.1} parent=39 // pred_fallthru
          _
        %s320 = sand.u32 %s38, 1
        %s321 = scalar_lea.sflag [#allocation3], %s320
        %s322 = sand.u32 %s38, 1
        %s323 = smul.addr %s322, 8
        %s324 = scalar_lea.vmem [#allocation2], %s323
        %p325 = pneg %p51
        %p326 = pneg %p48
        %p327 = pneg %p72
        %p328 = pneg %p69
        %p329 = pneg %p93
        %p330 = pneg %p90
        %p331 = pneg %p114
        %p332 = pneg %p111
        %p333 = pneg %p135
        %p334 = pneg %p132
        %p335 = pneg %p161
        %p336 = pneg %p158
        %s337 = sand.u32 %s148, 1
        %s338 = scalar_lea.sflag [#allocation4], %s337
        %s339 = sand.u32 %s148, 1
        %s340 = smul.addr %s339, 32
        %s341 = scalar_lea.vmem [#allocation10], %s340
        %p342 = pneg %p187
        %p343 = pneg %p184
        %s344 = sand.u32 %s30, 1
        %s345 = scalar_lea.sflag [#allocation12], %s344
        %s346 = sand.u32 %s174, 1
        %s347 = smul.addr %s346, 8
        %s348 = scalar_lea.vmem [#allocation11], %s347
        %p349 = pneg %p213
        %p350 = pneg %p210
        %s351 = sand.u32 %s30, 1
        %s352 = scalar_lea.sflag [#allocation12], %s351
        %s353 = sand.u32 %s200, 1
        %s354 = smul.addr %s353, 8
        %s355 = scalar_lea.vmem [#allocation13], %s354
        %v356 = vld [vmem:[%s303] sm:$0xff]
        %v357 = vmul.f32 %v356, %v356
        %358 = vadd.xlane.f32.xlu0 %v357
        %v359 = vpop.xlane.xlu0 %358
        %v360 = vrcp.pop 128.0
        %v361 = vmul.f32 %v359, %v360
        %v362 = vadd.f32 %v361, 1e-06
        %v363 = vrsqrt.pop %v362
        %v364 = vmul.f32 %v356, %v363
        %v365 = vld [vmem:[%s1] sm:$0x1]
        %v367 = vlaneseq
        %v368 = vshrl.u32 %v367, 7
        %v369 = vsub.s32 0, %v368
        %v370 = vrot.slane %v365, %v369
        %v372 = vmul.f32 %v364, %v370
        %v373 = vld [vmem:[#allocation5] sm:$0xff]
        %v374 = vld [vmem:[#allocation5 + $0x8] sm:$0xff]
        %v375 = vld [vmem:[#allocation5 + $0x10] sm:$0xff]
        %v376 = vld [vmem:[#allocation5 + $0x18] sm:$0xff]
        %v377 = vld [vmem:[#allocation5 + $0x20] sm:$0xff]
        %v378 = vld [vmem:[#allocation5 + $0x28] sm:$0xff]
        %v379 = vld [vmem:[#allocation5 + $0x30] sm:$0xff]
        %v380 = vld [vmem:[#allocation5 + $0x38] sm:$0xff]
        %v381 = vld [vmem:[#allocation5 + $0x40] sm:$0xff]
        %v382 = vld [vmem:[#allocation5 + $0x48] sm:$0xff]
        %v383 = vld [vmem:[#allocation5 + $0x50] sm:$0xff]
        %v384 = vld [vmem:[#allocation5 + $0x58] sm:$0xff]
        %v385 = vld [vmem:[#allocation5 + $0x60] sm:$0xff]
        %v386 = vld [vmem:[#allocation5 + $0x68] sm:$0xff]
        %v387 = vld [vmem:[#allocation5 + $0x70] sm:$0xff]
        %v388 = vld [vmem:[#allocation5 + $0x78] sm:$0xff]
        %v389 = vld [vmem:[#allocation5 + $0x80] sm:$0xff]
        %v390 = vld [vmem:[#allocation5 + $0x88] sm:$0xff]
        %v391 = vld [vmem:[#allocation5 + $0x90] sm:$0xff]
        %v392 = vld [vmem:[#allocation5 + $0x98] sm:$0xff]
        %v393 = vld [vmem:[#allocation5 + $0xa0] sm:$0xff]
        %v394 = vld [vmem:[#allocation5 + $0xa8] sm:$0xff]
        %v395 = vld [vmem:[#allocation5 + $0xb0] sm:$0xff]
        %v396 = vld [vmem:[#allocation5 + $0xb8] sm:$0xff]
        %v397 = vld [vmem:[#allocation5 + $0xc0] sm:$0xff]
        %v398 = vld [vmem:[#allocation5 + $0xc8] sm:$0xff]
        %v399 = vld [vmem:[#allocation5 + $0xd0] sm:$0xff]
        %v400 = vld [vmem:[#allocation5 + $0xd8] sm:$0xff]
        %v401 = vld [vmem:[#allocation5 + $0xe0] sm:$0xff]
        %v402 = vld [vmem:[#allocation5 + $0xe8] sm:$0xff]
        %v403 = vld [vmem:[#allocation5 + $0xf0] sm:$0xff]
        %v404 = vld [vmem:[#allocation5 + $0xf8] sm:$0xff]
        %v405 = vld [vmem:[#allocation5 + $0x100] sm:$0xff]
        %v406 = vld [vmem:[#allocation5 + $0x108] sm:$0xff]
        %v407 = vld [vmem:[#allocation5 + $0x110] sm:$0xff]
        %v408 = vld [vmem:[#allocation5 + $0x118] sm:$0xff]
        %v409 = vld [vmem:[#allocation5 + $0x120] sm:$0xff]
        %v410 = vld [vmem:[#allocation5 + $0x128] sm:$0xff]
        %v411 = vld [vmem:[#allocation5 + $0x130] sm:$0xff]
        %v412 = vld [vmem:[#allocation5 + $0x138] sm:$0xff]
        %v413 = vld [vmem:[#allocation5 + $0x140] sm:$0xff]
        %v414 = vld [vmem:[#allocation5 + $0x148] sm:$0xff]
        %v415 = vld [vmem:[#allocation5 + $0x150] sm:$0xff]
        %v416 = vld [vmem:[#allocation5 + $0x158] sm:$0xff]
        %v417 = vld [vmem:[#allocation5 + $0x160] sm:$0xff]
        %v418 = vld [vmem:[#allocation5 + $0x168] sm:$0xff]
        %v419 = vld [vmem:[#allocation5 + $0x170] sm:$0xff]
        %v420 = vld [vmem:[#allocation5 + $0x178] sm:$0xff]
        %v421 = vld [vmem:[#allocation5 + $0x180] sm:$0xff]
        %v422 = vld [vmem:[#allocation5 + $0x188] sm:$0xff]
        %v423 = vld [vmem:[#allocation5 + $0x190] sm:$0xff]
        %v424 = vld [vmem:[#allocation5 + $0x198] sm:$0xff]
        %v425 = vld [vmem:[#allocation5 + $0x1a0] sm:$0xff]
        %v426 = vld [vmem:[#allocation5 + $0x1a8] sm:$0xff]
        %v427 = vld [vmem:[#allocation5 + $0x1b0] sm:$0xff]
        %v428 = vld [vmem:[#allocation5 + $0x1b8] sm:$0xff]
        %v429 = vld [vmem:[#allocation5 + $0x1c0] sm:$0xff]
        %v430 = vld [vmem:[#allocation5 + $0x1c8] sm:$0xff]
        %v431 = vld [vmem:[#allocation5 + $0x1d0] sm:$0xff]
        %v432 = vld [vmem:[#allocation5 + $0x1d8] sm:$0xff]
        %v433 = vld [vmem:[#allocation5 + $0x1e0] sm:$0xff]
        %v434 = vld [vmem:[#allocation5 + $0x1e8] sm:$0xff]
        %v435 = vld [vmem:[#allocation5 + $0x1f0] sm:$0xff]
        %v436 = vld [vmem:[#allocation5 + $0x1f8] sm:$0xff]
        %437 = vmatprep.subr.mxu0 %v374
        %438 = vmatpush1.msra.mxu0 %v373
        %439 = vmatprep.subr.mxu0 %v378
        %440 = vmatpush1.msra.mxu0 %v377
        %441 = vmatprep.subr.mxu0 %v382
        %442 = vmatpush1.msra.mxu0 %v381
        %443 = vmatprep.subr.mxu0 %v386
        %444 = vmatpush1.msra.mxu0 %v385
        %445 = vmatprep.subr.mxu0 %v390
        %446 = vmatpush1.msra.mxu0 %v389
        %447 = vmatprep.subr.mxu0 %v394
        %448 = vmatpush1.msra.mxu0 %v393
        %449 = vmatprep.subr.mxu0 %v398
        %450 = vmatpush1.msra.mxu0 %v397
        %451 = vmatprep.subr.mxu0 %v402
        %452 = vmatpush1.msra.mxu0 %v401
        %453 = vmatprep.subr.mxu0 %v406
        %454 = vmatpush1.msra.mxu0 %v405
        %455 = vmatprep.subr.mxu0 %v410
        %456 = vmatpush1.msra.mxu0 %v409
        %457 = vmatprep.subr.mxu0 %v414
        %458 = vmatpush1.msra.mxu0 %v413
        %459 = vmatprep.subr.mxu0 %v418
        %460 = vmatpush1.msra.mxu0 %v417
        %461 = vmatprep.subr.mxu0 %v422
        %462 = vmatpush1.msra.mxu0 %v421
        %463 = vmatprep.subr.mxu0 %v426
        %464 = vmatpush1.msra.mxu0 %v425
        %465 = vmatprep.subr.mxu0 %v430
        %466 = vmatpush1.msra.mxu0 %v429
        %467 = vmatprep.subr.mxu0 %v434
        %468 = vmatpush1.msra.mxu0 %v433
        %469 = vmatprep.subr.mxu0 0.0
        %470 = vmatpush1.msra.mxu0 0.0
        %471 = vmatprep.subr.mxu0 0.0
        %472 = vmatpush1.msra.mxu0 0.0
        %473 = vmatprep.subr.mxu0 0.0
        %474 = vmatpush1.msra.mxu0 0.0
        %475 = vmatprep.subr.mxu0 0.0
        %476 = vmatpush1.msra.mxu0 0.0
        %477 = vmatprep.subr.mxu0 0.0
        %478 = vmatpush1.msra.mxu0 0.0
        %479 = vmatprep.subr.mxu0 0.0
        %480 = vmatpush1.msra.mxu0 0.0
        %481 = vmatprep.subr.mxu0 0.0
        %482 = vmatpush1.msra.mxu0 0.0
        %483 = vmatprep.subr.mxu0 0.0
        %484 = vmatpush1.msra.mxu0 0.0
        %485 = vmatprep.subr.mxu0 0.0
        %486 = vmatpush1.msra.mxu0 0.0
        %487 = vmatprep.subr.mxu0 0.0
        %488 = vmatpush1.msra.mxu0 0.0
        %489 = vmatprep.subr.mxu0 0.0
        %490 = vmatpush1.msra.mxu0 0.0
        %491 = vmatprep.subr.mxu0 0.0
        %492 = vmatpush1.msra.mxu0 0.0
        %493 = vmatprep.subr.mxu0 0.0
        %494 = vmatpush1.msra.mxu0 0.0
        %495 = vmatprep.subr.mxu0 0.0
        %496 = vmatpush1.msra.mxu0 0.0
        %497 = vmatprep.subr.mxu0 0.0
        %498 = vmatpush1.msra.mxu0 0.0
        %499 = vmatprep.subr.mxu0 0.0
        %500 = vmatpush1.msra.mxu0 0.0
        %501 = vmatprep.mubr.f32.mxu0 0.0
        %502 = vmatmul.mubr.f32.gmra.mrb[0].mxu0 %v372
        %v503 = vpop.f32.mrb[0].mxu0
        %v504 = vadd.f32 0.0, %v503
        %v505 = vpop.f32.mrb[0].mxu0
        %v506 = vadd.f32 0.0, %v505
        %507 = vdwg.mxu0
        %508 = vmatprep.subr.mxu0 %v376
        %509 = vmatpush1.msra.mxu0 %v375
        %510 = vmatprep.subr.mxu0 %v380
        %511 = vmatpush1.msra.mxu0 %v379
        %512 = vmatprep.subr.mxu0 %v384
        %513 = vmatpush1.msra.mxu0 %v383
        %514 = vmatprep.subr.mxu0 %v388
        %515 = vmatpush1.msra.mxu0 %v387
        %516 = vmatprep.subr.mxu0 %v392
        %517 = vmatpush1.msra.mxu0 %v391
        %518 = vmatprep.subr.mxu0 %v396
        %519 = vmatpush1.msra.mxu0 %v395
        %520 = vmatprep.subr.mxu0 %v400
        %521 = vmatpush1.msra.mxu0 %v399
        %522 = vmatprep.subr.mxu0 %v404
        %523 = vmatpush1.msra.mxu0 %v403
        %524 = vmatprep.subr.mxu0 %v408
        %525 = vmatpush1.msra.mxu0 %v407
        %526 = vmatprep.subr.mxu0 %v412
        %527 = vmatpush1.msra.mxu0 %v411
        %528 = vmatprep.subr.mxu0 %v416
        %529 = vmatpush1.msra.mxu0 %v415
        %530 = vmatprep.subr.mxu0 %v420
        %531 = vmatpush1.msra.mxu0 %v419
        %532 = vmatprep.subr.mxu0 %v424
        %533 = vmatpush1.msra.mxu0 %v423
        %534 = vmatprep.subr.mxu0 %v428
        %535 = vmatpush1.msra.mxu0 %v427
        %536 = vmatprep.subr.mxu0 %v432
        %537 = vmatpush1.msra.mxu0 %v431
        %538 = vmatprep.subr.mxu0 %v436
        %539 = vmatpush1.msra.mxu0 %v435
        %540 = vmatprep.subr.mxu0 0.0
        %541 = vmatpush1.msra.mxu0 0.0
        %542 = vmatprep.subr.mxu0 0.0
        %543 = vmatpush1.msra.mxu0 0.0
        %544 = vmatprep.subr.mxu0 0.0
        %545 = vmatpush1.msra.mxu0 0.0
        %546 = vmatprep.subr.mxu0 0.0
        %547 = vmatpush1.msra.mxu0 0.0
        %548 = vmatprep.subr.mxu0 0.0
        %549 = vmatpush1.msra.mxu0 0.0
        %550 = vmatprep.subr.mxu0 0.0
        %551 = vmatpush1.msra.mxu0 0.0
        %552 = vmatprep.subr.mxu0 0.0
        %553 = vmatpush1.msra.mxu0 0.0
        %554 = vmatprep.subr.mxu0 0.0
        %555 = vmatpush1.msra.mxu0 0.0
        %556 = vmatprep.subr.mxu0 0.0
        %557 = vmatpush1.msra.mxu0 0.0
        %558 = vmatprep.subr.mxu0 0.0
        %559 = vmatpush1.msra.mxu0 0.0
        %560 = vmatprep.subr.mxu0 0.0
        %561 = vmatpush1.msra.mxu0 0.0
        %562 = vmatprep.subr.mxu0 0.0
        %563 = vmatpush1.msra.mxu0 0.0
        %564 = vmatprep.subr.mxu0 0.0
        %565 = vmatpush1.msra.mxu0 0.0
        %566 = vmatprep.subr.mxu0 0.0
        %567 = vmatpush1.msra.mxu0 0.0
        %568 = vmatprep.subr.mxu0 0.0
        %569 = vmatpush1.msra.mxu0 0.0
        %570 = vmatprep.subr.mxu0 0.0
        %571 = vmatpush1.msra.mxu0 0.0
        %572 = vmatprep.mubr.f32.mxu0 0.0
        %573 = vmatmul.mubr.f32.gmra.mrb[0].mxu0 %v372
        %v574 = vpop.f32.mrb[0].mxu0
        %v575 = vadd.f32 0.0, %v574
        %v576 = vpop.f32.mrb[0].mxu0
        %v577 = vadd.f32 0.0, %v576
        %578 = vdwg.mxu0
        %579 = vst [vmem:[%s341] sm:$0xff] %v504
        %580 = vst [vmem:[%s341 + $0x8] sm:$0xff] %v506
        %581 = vst [vmem:[%s341 + $0x10] sm:$0xff] %v575
        %582 = vst [vmem:[%s341 + $0x18] sm:$0xff] %v577
        %v583 = vld [vmem:[#allocation7] sm:$0xff]
        %v584 = vld [vmem:[#allocation7 + $0x8] sm:$0xff]
        %v585 = vld [vmem:[#allocation7 + $0x10] sm:$0xff]
        %v586 = vld [vmem:[#allocation7 + $0x18] sm:$0xff]
        %v587 = vld [vmem:[#allocation7 + $0x20] sm:$0xff]
        %v588 = vld [vmem:[#allocation7 + $0x28] sm:$0xff]
        %v589 = vld [vmem:[#allocation7 + $0x30] sm:$0xff]
        %v590 = vld [vmem:[#allocation7 + $0x38] sm:$0xff]
        %v591 = vld [vmem:[#allocation7 + $0x40] sm:$0xff]
        %v592 = vld [vmem:[#allocation7 + $0x48] sm:$0xff]
        %v593 = vld [vmem:[#allocation7 + $0x50] sm:$0xff]
        %v594 = vld [vmem:[#allocation7 + $0x58] sm:$0xff]
        %v595 = vld [vmem:[#allocation7 + $0x60] sm:$0xff]
        %v596 = vld [vmem:[#allocation7 + $0x68] sm:$0xff]
        %v597 = vld [vmem:[#allocation7 + $0x70] sm:$0xff]
        %v598 = vld [vmem:[#allocation7 + $0x78] sm:$0xff]
        %599 = vmatprep.subr.mxu0 0.0
        %600 = vmatpush1.msra.mxu0 %v583
        %601 = vmatprep.subr.mxu0 0.0
        %602 = vmatpush1.msra.mxu0 %v584
        %603 = vmatprep.subr.mxu0 0.0
        %604 = vmatpush1.msra.mxu0 %v585
        %605 = vmatprep.subr.mxu0 0.0
        %606 = vmatpush1.msra.mxu0 %v586
        %607 = vmatprep.subr.mxu0 0.0
        %608 = vmatpush1.msra.mxu0 %v587
        %609 = vmatprep.subr.mxu0 0.0
        %610 = vmatpush1.msra.mxu0 %v588
        %611 = vmatprep.subr.mxu0 0.0
        %612 = vmatpush1.msra.mxu0 %v589
        %613 = vmatprep.subr.mxu0 0.0
        %614 = vmatpush1.msra.mxu0 %v590
        %615 = vmatprep.subr.mxu0 0.0
        %616 = vmatpush1.msra.mxu0 %v591
        %617 = vmatprep.subr.mxu0 0.0
        %618 = vmatpush1.msra.mxu0 %v592
        %619 = vmatprep.subr.mxu0 0.0
        %620 = vmatpush1.msra.mxu0 %v593
        %621 = vmatprep.subr.mxu0 0.0
        %622 = vmatpush1.msra.mxu0 %v594
        %623 = vmatprep.subr.mxu0 0.0
        %624 = vmatpush1.msra.mxu0 %v595
        %625 = vmatprep.subr.mxu0 0.0
        %626 = vmatpush1.msra.mxu0 %v596
        %627 = vmatprep.subr.mxu0 0.0
        %628 = vmatpush1.msra.mxu0 %v597
        %629 = vmatprep.subr.mxu0 0.0
        %630 = vmatpush1.msra.mxu0 %v598
        %631 = vmatprep.subr.mxu0 0.0
        %632 = vmatpush1.msra.mxu0 0.0
        %633 = vmatprep.subr.mxu0 0.0
        %634 = vmatpush1.msra.mxu0 0.0
        %635 = vmatprep.subr.mxu0 0.0
        %636 = vmatpush1.msra.mxu0 0.0
        %637 = vmatprep.subr.mxu0 0.0
        %638 = vmatpush1.msra.mxu0 0.0
        %639 = vmatprep.subr.mxu0 0.0
        %640 = vmatpush1.msra.mxu0 0.0
        %641 = vmatprep.subr.mxu0 0.0
        %642 = vmatpush1.msra.mxu0 0.0
        %643 = vmatprep.subr.mxu0 0.0
        %644 = vmatpush1.msra.mxu0 0.0
        %645 = vmatprep.subr.mxu0 0.0
        %646 = vmatpush1.msra.mxu0 0.0
        %647 = vmatprep.subr.mxu0 0.0
        %648 = vmatpush1.msra.mxu0 0.0
        %649 = vmatprep.subr.mxu0 0.0
        %650 = vmatpush1.msra.mxu0 0.0
        %651 = vmatprep.subr.mxu0 0.0
        %652 = vmatpush1.msra.mxu0 0.0
        %653 = vmatprep.subr.mxu0 0.0
        %654 = vmatpush1.msra.mxu0 0.0
        %655 = vmatprep.subr.mxu0 0.0
        %656 = vmatpush1.msra.mxu0 0.0
        %657 = vmatprep.subr.mxu0 0.0
        %658 = vmatpush1.msra.mxu0 0.0
        %659 = vmatprep.subr.mxu0 0.0
        %660 = vmatpush1.msra.mxu0 0.0
        %661 = vmatprep.subr.mxu0 0.0
        %662 = vmatpush1.msra.mxu0 0.0
        %663 = vmatprep.mubr.f32.mxu0 0.0
        %664 = vmatmul.mubr.f32.gmra.mrb[0].mxu0 %v372
        %v665 = vpop.f32.mrb[0].mxu0
        %v666 = vadd.f32 0.0, %v665
        %v667 = vpop.f32.mrb[0].mxu0
        %668 = vdwg.mxu0
        %669 = vst [vmem:[%s348] sm:$0xff] %v666
        %v670 = vld [vmem:[#allocation8] sm:$0xff]
        %v671 = vld [vmem:[#allocation8 + $0x8] sm:$0xff]
        %v672 = vld [vmem:[#allocation8 + $0x10] sm:$0xff]
        %v673 = vld [vmem:[#allocation8 + $0x18] sm:$0xff]
        %v674 = vld [vmem:[#allocation8 + $0x20] sm:$0xff]
        %v675 = vld [vmem:[#allocation8 + $0x28] sm:$0xff]
        %v676 = vld [vmem:[#allocation8 + $0x30] sm:$0xff]
        %v677 = vld [vmem:[#allocation8 + $0x38] sm:$0xff]
        %v678 = vld [vmem:[#allocation8 + $0x40] sm:$0xff]
        %v679 = vld [vmem:[#allocation8 + $0x48] sm:$0xff]
        %v680 = vld [vmem:[#allocation8 + $0x50] sm:$0xff]
        %v681 = vld [vmem:[#allocation8 + $0x58] sm:$0xff]
        %v682 = vld [vmem:[#allocation8 + $0x60] sm:$0xff]
        %v683 = vld [vmem:[#allocation8 + $0x68] sm:$0xff]
        %v684 = vld [vmem:[#allocation8 + $0x70] sm:$0xff]
        %v685 = vld [vmem:[#allocation8 + $0x78] sm:$0xff]
        %686 = vmatprep.subr.mxu0 0.0
        %687 = vmatpush1.msra.mxu0 %v670
        %688 = vmatprep.subr.mxu0 0.0
        %689 = vmatpush1.msra.mxu0 %v671
        %690 = vmatprep.subr.mxu0 0.0
        %691 = vmatpush1.msra.mxu0 %v672
        %692 = vmatprep.subr.mxu0 0.0
        %693 = vmatpush1.msra.mxu0 %v673
        %694 = vmatprep.subr.mxu0 0.0
        %695 = vmatpush1.msra.mxu0 %v674
        %696 = vmatprep.subr.mxu0 0.0
        %697 = vmatpush1.msra.mxu0 %v675
        %698 = vmatprep.subr.mxu0 0.0
        %699 = vmatpush1.msra.mxu0 %v676
        %700 = vmatprep.subr.mxu0 0.0
        %701 = vmatpush1.msra.mxu0 %v677
        %702 = vmatprep.subr.mxu0 0.0
        %703 = vmatpush1.msra.mxu0 %v678
        %704 = vmatprep.subr.mxu0 0.0
        %705 = vmatpush1.msra.mxu0 %v679
        %706 = vmatprep.subr.mxu0 0.0
        %707 = vmatpush1.msra.mxu0 %v680
        %708 = vmatprep.subr.mxu0 0.0
        %709 = vmatpush1.msra.mxu0 %v681
        %710 = vmatprep.subr.mxu0 0.0
        %711 = vmatpush1.msra.mxu0 %v682
        %712 = vmatprep.subr.mxu0 0.0
        %713 = vmatpush1.msra.mxu0 %v683
        %714 = vmatprep.subr.mxu0 0.0
        %715 = vmatpush1.msra.mxu0 %v684
        %716 = vmatprep.subr.mxu0 0.0
        %717 = vmatpush1.msra.mxu0 %v685
        %718 = vmatprep.subr.mxu0 0.0
        %719 = vmatpush1.msra.mxu0 0.0
        %720 = vmatprep.subr.mxu0 0.0
        %721 = vmatpush1.msra.mxu0 0.0
        %722 = vmatprep.subr.mxu0 0.0
        %723 = vmatpush1.msra.mxu0 0.0
        %724 = vmatprep.subr.mxu0 0.0
        %725 = vmatpush1.msra.mxu0 0.0
        %726 = vmatprep.subr.mxu0 0.0
        %727 = vmatpush1.msra.mxu0 0.0
        %728 = vmatprep.subr.mxu0 0.0
        %729 = vmatpush1.msra.mxu0 0.0
        %730 = vmatprep.subr.mxu0 0.0
        %731 = vmatpush1.msra.mxu0 0.0
        %732 = vmatprep.subr.mxu0 0.0
        %733 = vmatpush1.msra.mxu0 0.0
        %734 = vmatprep.subr.mxu0 0.0
        %735 = vmatpush1.msra.mxu0 0.0
        %736 = vmatprep.subr.mxu0 0.0
        %737 = vmatpush1.msra.mxu0 0.0
        %738 = vmatprep.subr.mxu0 0.0
        %739 = vmatpush1.msra.mxu0 0.0
        %740 = vmatprep.subr.mxu0 0.0
        %741 = vmatpush1.msra.mxu0 0.0
        %742 = vmatprep.subr.mxu0 0.0
        %743 = vmatpush1.msra.mxu0 0.0
        %744 = vmatprep.subr.mxu0 0.0
        %745 = vmatpush1.msra.mxu0 0.0
        %746 = vmatprep.subr.mxu0 0.0
        %747 = vmatpush1.msra.mxu0 0.0
        %748 = vmatprep.subr.mxu0 0.0
        %749 = vmatpush1.msra.mxu0 0.0
        %750 = vmatprep.mubr.f32.mxu0 0.0
        %751 = vmatmul.mubr.f32.gmra.mrb[0].mxu0 %v372
        %v752 = vpop.f32.mrb[0].mxu0
        %v753 = vadd.f32 0.0, %v752
        %v754 = vpop.f32.mrb[0].mxu0
        %755 = vdwg.mxu0
        %756 = vst [vmem:[%s355] sm:$0xff] %v753
        %s757 = sand.u32 %s148, 1
        %s758 = scalar_lea.sflag [#allocation4], %s757
        %s759 = sand.u32 %s148, 1
        %s760 = smul.addr %s759, 32
        %s761 = scalar_lea.vmem [#allocation10], %s760
        %s762 = sand.u32 %s30, 1
        %s763 = scalar_lea.sflag [#allocation12], %s762
        %s764 = sand.u32 %s174, 1
        %s765 = smul.addr %s764, 8
        %s766 = scalar_lea.vmem [#allocation11], %s765
        %s767 = sand.u32 %s30, 1
        %s768 = scalar_lea.sflag [#allocation12], %s767
        %s769 = sand.u32 %s200, 1
        %s770 = smul.addr %s769, 8
        %s771 = scalar_lea.vmem [#allocation13], %s770
        // Predicated region
        $region57: #{tpu_custom_call.1} parent=39 // pred_check
          %p772 = pneg %p158
        $region58: #{tpu_custom_call.1} parent=39 // pred_check_branch
          %774 = sbr.rel (%p772) target = $region60
        $region59: #{tpu_custom_call.1} parent=39 // pred_region
          %s776 = ssub.s32 512, 512
          %777 = vsyncadd %s758, %s776
          %s778 = smul.addr %s30, 4
          %s779 = smul.addr %s778, 128
          %s780 = scalar_lea.hbm %s5, %s779
          %s782 = sshll.u32 %s761, 4
          %s783 = int_to_ptr.vmem [resolvable:$true] %s782
          %785 = dma.vmem_to_hbm [thread:$0]  %s783, 512, %s780, %s758
        $region60: #{tpu_custom_call.1} parent=39 // pred_fallthru
          _
        // Predicated region
        $region61: #{tpu_custom_call.1} parent=39 // pred_check
          %p786 = pneg %p184
        $region62: #{tpu_custom_call.1} parent=39 // pred_check_branch
          %788 = sbr.rel (%p786) target = $region64
        $region63: #{tpu_custom_call.1} parent=39 // pred_region
          %s790 = ssub.s32 128, 128
          %791 = vsyncadd %s763, %s790
          %s792 = smul.addr %s30, 128
          %s793 = scalar_lea.hbm %s6, %s792
          %s795 = sshll.u32 %s766, 4
          %s796 = int_to_ptr.vmem [resolvable:$true] %s795
          %798 = dma.vmem_to_hbm [thread:$0]  %s796, 128, %s793, %s763
        $region64: #{tpu_custom_call.1} parent=39 // pred_fallthru
          _
        // Predicated region
        $region65: #{tpu_custom_call.1} parent=39 // pred_check
          %p799 = pneg %p210
        $region66: #{tpu_custom_call.1} parent=39 // pred_check_branch
          %801 = sbr.rel (%p799) target = $region68
        $region67: #{tpu_custom_call.1} parent=39 // pred_region
          %s803 = ssub.s32 128, 128
          %804 = vsyncadd %s768, %s803
          %s805 = smul.addr %s30, 128
          %s806 = scalar_lea.hbm %s7, %s805
          %s808 = sshll.u32 %s771, 4
          %s809 = int_to_ptr.vmem [resolvable:$true] %s808
          %811 = dma.vmem_to_hbm [thread:$0]  %s809, 128, %s806, %s768
        $region68: #{tpu_custom_call.1} parent=39 // pred_fallthru
          _
      $region40: #{tpu_custom_call.1} parent=5 // pred_fallthru
        _
      %p812 = scmp.le.s32.totalorder 2, %s25
      // Predicated region
      $region69: #{tpu_custom_call.1} parent=5 // pred_check
        %p813 = pneg %p812
      $region70: #{tpu_custom_call.1} parent=5 // pred_check_branch
        %815 = sbr.rel (%p813) target = $region72
      $region71: #{tpu_custom_call.1} parent=5 // pred_region
        %s816 = ssub.s32 %s25, 2
        // Predicated region
        $region73: #{tpu_custom_call.1} parent=71 // pred_check
          %p817 = pneg %p164
        $region74: #{tpu_custom_call.1} parent=71 // pred_check_branch
          %819 = sbr.rel (%p817) target = $region76
        $region75: #{tpu_custom_call.1} parent=71 // pred_region
          %s820 = sand.u32 %s149, 1
          %s821 = scalar_lea.sflag [#allocation4], %s820
          %s822 = sand.u32 %s149, 1
          %s823 = smul.addr %s822, 32
          %s824 = scalar_lea.vmem [#allocation10], %s823
          %825 = dma.done %s821, 512
        $region76: #{tpu_custom_call.1} parent=71 // pred_fallthru
          _
        // Predicated region
        $region77: #{tpu_custom_call.1} parent=71 // pred_check
          %p826 = pneg %p190
        $region78: #{tpu_custom_call.1} parent=71 // pred_check_branch
          %828 = sbr.rel (%p826) target = $region80
        $region79: #{tpu_custom_call.1} parent=71 // pred_region
          %s829 = sand.u32 %s31, 1
          %s830 = scalar_lea.sflag [#allocation12], %s829
          %s831 = sand.u32 %s175, 1
          %s832 = smul.addr %s831, 8
          %s833 = scalar_lea.vmem [#allocation11], %s832
          %834 = dma.done %s830, 128
        $region80: #{tpu_custom_call.1} parent=71 // pred_fallthru
          _
        // Predicated region
        $region81: #{tpu_custom_call.1} parent=71 // pred_check
          %p835 = pneg %p216
        $region82: #{tpu_custom_call.1} parent=71 // pred_check_branch
          %837 = sbr.rel (%p835) target = $region84
        $region83: #{tpu_custom_call.1} parent=71 // pred_region
          %s838 = sand.u32 %s31, 1
          %s839 = scalar_lea.sflag [#allocation12], %s838
          %s840 = sand.u32 %s201, 1
          %s841 = smul.addr %s840, 8
          %s842 = scalar_lea.vmem [#allocation13], %s841
          %843 = dma.done %s839, 128
        $region84: #{tpu_custom_call.1} parent=71 // pred_fallthru
          _
      $region72: #{tpu_custom_call.1} parent=5 // pred_fallthru
        _
    $region6: #{tpu_custom_call.1} parent=1 // loop_footer
      %s29 = sadd.s32 1, %s25
    $region7: #{tpu_custom_call.1} parent=1 // loop_footer_branch
      %24 = sbr.rel target = $region3
    $region8: #{tpu_custom_call.1} parent=1 // loop_exit
      _
    %844 = vsyncpa [#allocation3], 1
    %s845 = scalar_lea.sflag [#allocation3], 1
    %846 = vsyncpa %s845, 1
    %847 = vsyncpa [#allocation6], 1
    %848 = vsyncpa [#allocation9], 1
    %849 = vsyncpa [#allocation4], 1
    %s850 = scalar_lea.sflag [#allocation4], 1
    %851 = vsyncpa %s850, 1
    %852 = vsyncpa [#allocation12], 1
    %s853 = scalar_lea.sflag [#allocation12], 1
    %854 = vsyncpa %s853, 1

</llo_original>
